<compile_context>
chip_gen: v7x
topology: tpu7x:2x2x1
jax: 0.10.0
libtpu: 0.0.40
codegen_flags: <defaults>
</compile_context>

<pallas_src>
import functools

import jax
import jax.numpy as jnp
from jax.experimental import pallas as pl
from jax.experimental.pallas import tpu as pltpu


# Physical constants (match nn.Module __init__ defaults; no learnable params).
DT = 0.05
M = 1.0
L = 1.0
G = 10.0
MAX_SPEED = 8.0
MAX_TORQUE = 2.0

LANES = 1024          # lane-dense last dim (multiple of 128)
SUBLANES = 8          # f32 sublane tile
MAX_BLOCK_ROWS = 512  # 512*1024*4B = 2 MiB/array/block; x5 arrays x2 bufs = 20 MiB VMEM


def _pendulum_kernel(theta_ref, theta_dot_ref, action_ref,
                     new_theta_ref, new_theta_dot_ref):
    theta = theta_ref[...]
    theta_dot = theta_dot_ref[...]

    # u = clip(action, -max_torque, max_torque)
    u = jnp.clip(action_ref[...], -MAX_TORQUE, MAX_TORQUE)

    coef_sin = 3.0 * G / (2.0 * L)
    coef_u = 3.0 / (M * L ** 2)
    new_theta_dot = theta_dot + (coef_sin * jnp.sin(theta) + coef_u * u) * DT
    new_theta_dot = jnp.clip(new_theta_dot, -MAX_SPEED, MAX_SPEED)

    new_theta_ref[...] = theta + new_theta_dot * DT
    new_theta_dot_ref[...] = new_theta_dot


def _round_up(n, m):
    return ((n + m - 1) // m) * m


def _pack(x, rows, cols):
    """Flatten x into a lane-dense (rows, cols) f32 slab, zero-padded."""
    flat = x.reshape(-1).astype(jnp.float32)
    pad = rows * cols - flat.shape[0]
    if pad:
        flat = jnp.pad(flat, (0, pad))
    return flat.reshape(rows, cols)


@functools.partial(jax.jit, static_argnames=("block_rows",))
def pendulum_forward(state, action, *, block_rows=None):
    """Pallas implementation of Pendulum.forward for arbitrary state shapes.

    state: dict with 'theta', 'theta_dot' arrays (same shape/dtype as action).
    block_rows: optional row-tile override (mainly for testing the tiled path).
    Returns dict(theta=new_theta, theta_dot=new_theta_dot) in the input shape.
    """
    theta = state["theta"]
    theta_dot = state["theta_dot"]
    assert theta.shape == theta_dot.shape == action.shape
    orig_shape = theta.shape
    orig_dtype = theta.dtype
    n = theta.size

    # Lane-dense packing: rows of 1024 lanes, rows padded to the sublane tile.
    rows = max(_round_up(pl.cdiv(n, LANES), SUBLANES), SUBLANES)
    if block_rows is None:
        tr = rows if rows <= MAX_BLOCK_ROWS else MAX_BLOCK_ROWS
    else:
        tr = min(block_rows, rows)
    tr = _round_up(tr, SUBLANES)
    rows = _round_up(rows, tr)          # whole number of row tiles
    grid = (rows // tr,)

    th = _pack(theta, rows, LANES)
    thd = _pack(theta_dot, rows, LANES)
    act = _pack(action, rows, LANES)

    spec = pl.BlockSpec((tr, LANES), lambda i: (i, 0))
    out_shape = (
        jax.ShapeDtypeStruct((rows, LANES), jnp.float32),  # new_theta
        jax.ShapeDtypeStruct((rows, LANES), jnp.float32),  # new_theta_dot
    )

    new_theta, new_theta_dot = pl.pallas_call(
        _pendulum_kernel,
        out_shape=out_shape,
        grid_spec=pltpu.PrefetchScalarGridSpec(
            num_scalar_prefetch=0,
            grid=grid,
            in_specs=[spec, spec, spec],
            out_specs=[spec, spec],
        ),
        # Write new state over the packed old state buffers (cheap in-place
        # stepping for rollout loops; inputs here are fresh intermediates).
        input_output_aliases={0: 0, 1: 1},
        compiler_params=pltpu.CompilerParams(
            dimension_semantics=("parallel",),   # shards grid over v7x's 2 TCs
            vmem_limit_bytes=32 * 1024 * 1024,   # explicit, portable v5e..v7x
        ),
    )(th, thd, act)

    new_theta = new_theta.reshape(-1)[:n].reshape(orig_shape).astype(orig_dtype)
    new_theta_dot = (
        new_theta_dot.reshape(-1)[:n].reshape(orig_shape).astype(orig_dtype)
    )
    return dict(theta=new_theta, theta_dot=new_theta_dot)


def _reference_forward(state, action):
    # Pure-JAX reference mirroring the PyTorch/numpy semantics.
    theta = state["theta"]
    theta_dot = state["theta_dot"]
    u = jnp.clip(action, -MAX_TORQUE, MAX_TORQUE)
    new_theta_dot = theta_dot + (3.0 * G / (2.0 * L) * jnp.sin(theta)
                                 + 3.0 / (M * L ** 2) * u) * DT
    new_theta_dot = jnp.clip(new_theta_dot, -MAX_SPEED, MAX_SPEED)
    new_theta = theta + new_theta_dot * DT
    return dict(theta=new_theta, theta_dot=new_theta_dot)


if __name__ == "__main__":
    key = jax.random.PRNGKey(0)
    k1, k2, k3 = jax.random.split(key, 3)

    # Test 1: a small batch of environments with a non-aligned shape to
    # exercise the flatten/pad/lane-dense packing path (single grid step).
    shape = (7, 130)
    theta = jax.random.uniform(k1, shape, jnp.float32, -jnp.pi, jnp.pi)
    theta_dot = jax.random.uniform(k2, shape, jnp.float32, -8.0, 8.0)
    action = jax.random.uniform(k3, shape, jnp.float32, -3.0, 3.0)
    state = dict(theta=theta, theta_dot=theta_dot)

    out = pendulum_forward(state, action)
    jax.block_until_ready(out)
    ref = _reference_forward(state, action)
    assert jnp.allclose(out["theta"], ref["theta"], atol=1e-5, rtol=1e-5)
    assert jnp.allclose(out["theta_dot"], ref["theta_dot"], atol=1e-5, rtol=1e-5)

    # Test 2: force a small row tile to exercise the multi-block pipelined
    # path (40 packed rows, block_rows=8 -> grid=(5,)).
    shape2 = (40, 1024)
    theta2 = jax.random.uniform(k1, shape2, jnp.float32, -jnp.pi, jnp.pi)
    theta_dot2 = jax.random.uniform(k2, shape2, jnp.float32, -8.0, 8.0)
    action2 = jax.random.uniform(k3, shape2, jnp.float32, -3.0, 3.0)
    state2 = dict(theta=theta2, theta_dot=theta_dot2)

    out2 = pendulum_forward(state2, action2, block_rows=8)
    jax.block_until_ready(out2)
    ref2 = _reference_forward(state2, action2)
    assert jnp.allclose(out2["theta"], ref2["theta"], atol=1e-5, rtol=1e-5)
    assert jnp.allclose(out2["theta_dot"], ref2["theta_dot"], atol=1e-5, rtol=1e-5)

    print("KERNEL_OK")
</pallas_src>

<mosaic_0001>
module attributes {stable_mosaic.version = 11 : i64} {
  func.func @_pendulum_kernel(%arg0: i32, %arg1: memref<8x1024xf32, #tpu.memory_space<vmem>>, %arg2: memref<8x1024xf32, #tpu.memory_space<vmem>>, %arg3: memref<8x1024xf32, #tpu.memory_space<vmem>>, %arg4: memref<8x1024xf32, #tpu.memory_space<vmem>>, %arg5: memref<8x1024xf32, #tpu.memory_space<vmem>>) attributes {dimension_semantics = [#tpu.dimension_semantics<parallel>], iteration_bounds = array<i64: 1>, scalar_prefetch = 0 : i64, scratch_operands = 0 : i64, tpu.core_type = #tpu.core_type<tc>, window_params = [{transform_indices = @transform_0, window_bounds = array<i64: 8, 1024>}, {transform_indices = @transform_1, window_bounds = array<i64: 8, 1024>}, {transform_indices = @transform_2, window_bounds = array<i64: 8, 1024>}, {transform_indices = @transform_3, window_bounds = array<i64: 8, 1024>}, {transform_indices = @transform_4, window_bounds = array<i64: 8, 1024>}]} {
    %c0 = arith.constant 0 : index
    %c0_0 = arith.constant 0 : index
    %0 = vector.load %arg1[%c0, %c0_0] : memref<8x1024xf32, #tpu.memory_space<vmem>>, vector<8x1024xf32>
    %c0_1 = arith.constant 0 : index
    %c0_2 = arith.constant 0 : index
    %1 = vector.load %arg2[%c0_1, %c0_2] : memref<8x1024xf32, #tpu.memory_space<vmem>>, vector<8x1024xf32>
    %c0_3 = arith.constant 0 : index
    %c0_4 = arith.constant 0 : index
    %2 = vector.load %arg3[%c0_3, %c0_4] : memref<8x1024xf32, #tpu.memory_space<vmem>>, vector<8x1024xf32>
    %cst = arith.constant -2.000000e+00 : f32
    %cst_5 = arith.constant 2.000000e+00 : f32
    %3 = vector.broadcast %cst : f32 to vector<8x1024xf32>
    %4 = arith.maximumf %3, %2 : vector<8x1024xf32>
    %5 = vector.broadcast %cst_5 : f32 to vector<8x1024xf32>
    %6 = arith.minimumf %5, %4 : vector<8x1024xf32>
    %7 = math.sin %0 : vector<8x1024xf32>
    %cst_6 = arith.constant 1.500000e+01 : f32
    %8 = vector.broadcast %cst_6 : f32 to vector<8x1024xf32>
    %9 = arith.mulf %8, %7 : vector<8x1024xf32>
    %cst_7 = arith.constant 3.000000e+00 : f32
    %10 = vector.broadcast %cst_7 : f32 to vector<8x1024xf32>
    %11 = arith.mulf %10, %6 : vector<8x1024xf32>
    %12 = arith.addf %9, %11 : vector<8x1024xf32>
    %cst_8 = arith.constant 5.000000e-02 : f32
    %13 = vector.broadcast %cst_8 : f32 to vector<8x1024xf32>
    %14 = arith.mulf %12, %13 : vector<8x1024xf32>
    %15 = arith.addf %1, %14 : vector<8x1024xf32>
    %cst_9 = arith.constant -8.000000e+00 : f32
    %cst_10 = arith.constant 8.000000e+00 : f32
    %16 = vector.broadcast %cst_9 : f32 to vector<8x1024xf32>
    %17 = arith.maximumf %16, %15 : vector<8x1024xf32>
    %18 = vector.broadcast %cst_10 : f32 to vector<8x1024xf32>
    %19 = arith.minimumf %18, %17 : vector<8x1024xf32>
    %cst_11 = arith.constant 5.000000e-02 : f32
    %20 = vector.broadcast %cst_11 : f32 to vector<8x1024xf32>
    %21 = arith.mulf %19, %20 : vector<8x1024xf32>
    %22 = arith.addf %0, %21 : vector<8x1024xf32>
    %c0_12 = arith.constant 0 : index
    %c0_13 = arith.constant 0 : index
    %23 = vector.load %arg4[%c0_12, %c0_13] : memref<8x1024xf32, #tpu.memory_space<vmem>>, vector<8x1024xf32>
    tpu.vector_store %arg4[%c0_12, %c0_13], %22 {strides = array<i32>} : memref<8x1024xf32, #tpu.memory_space<vmem>>, vector<8x1024xf32>,
    %c0_14 = arith.constant 0 : index
    %c0_15 = arith.constant 0 : index
    %24 = vector.load %arg5[%c0_14, %c0_15] : memref<8x1024xf32, #tpu.memory_space<vmem>>, vector<8x1024xf32>
    tpu.vector_store %arg5[%c0_14, %c0_15], %19 {strides = array<i32>} : memref<8x1024xf32, #tpu.memory_space<vmem>>, vector<8x1024xf32>,
    return
  }
  func.func @transform_0(%arg0: i32) -> (i32, i32) {
    %c0_i32 = arith.constant 0 : i32
    %c0_i32_0 = arith.constant 0 : i32
    return %arg0, %c0_i32 : i32, i32
  }
  func.func @transform_1(%arg0: i32) -> (i32, i32) {
    %c0_i32 = arith.constant 0 : i32
    %c0_i32_0 = arith.constant 0 : i32
    return %arg0, %c0_i32 : i32, i32
  }
  func.func @transform_2(%arg0: i32) -> (i32, i32) {
    %c0_i32 = arith.constant 0 : i32
    %c0_i32_0 = arith.constant 0 : i32
    return %arg0, %c0_i32 : i32, i32
  }
  func.func @transform_3(%arg0: i32) -> (i32, i32) {
    %c0_i32 = arith.constant 0 : i32
    %c0_i32_0 = arith.constant 0 : i32
    return %arg0, %c0_i32 : i32, i32
  }
  func.func @transform_4(%arg0: i32) -> (i32, i32) {
    %c0_i32 = arith.constant 0 : i32
    %c0_i32_0 = arith.constant 0 : i32
    return %arg0, %c0_i32 : i32, i32
  }
}

</mosaic_0001>

<llo_original>
// kernel: pendulum_forward.1
$region0: #{pendulum_forward.1}
  #allocation0 [shape = 'u32[]', space=smem, size = 0x4, offset = 0x4, fixed_abs, tag = 'smem constant byte address 0x4 - core index']
  #allocation1 [shape = 'u32[144,128]{1,0:T(1,128)}', space=vmem, size = 0x12000, scoped, tag = 'internal scratch']
  %s0 = inlined_call_operand.vmem [shape: f32[8,1024], index: 0, kind: input, shape index: {}, may-alias: {0,3}]
  %s1 = inlined_call_operand.vmem [shape: f32[8,1024], index: 1, kind: input, shape index: {}, may-alias: {1,4}]
  %s2 = inlined_call_operand.vmem [shape: f32[8,1024], index: 2, kind: input, shape index: {}]
  %s3 = inlined_call_operand.vmem [shape: f32[8,1024], index: 3, kind: output, shape index: {0}, may-alias: {0,3}]
  %s4 = inlined_call_operand.vmem [shape: f32[8,1024], index: 4, kind: output, shape index: {1}, may-alias: {1,4}]
  %5 = xla_tuple %s3, %s4
  %s6 = sld [smem:[#allocation0]]
  $region30: #{pendulum_forward.1} parent=0
    _
  %s8 = ssub.s32 1, %s6
  %s9 = scalar_select 0, %s8, %s6
  // Predicated region
  $region2: #{pendulum_forward.1} parent=0 // pred_check
    _
  $region3: #{pendulum_forward.1} parent=0 // pred_check_branch
    %11 = sbr.rel (0) target = $region5
  $region4: #{pendulum_forward.1} parent=0 // pred_region
    _
  $region5: #{pendulum_forward.1} parent=0 // pred_fallthru
    _
  // Predicated region
  $region6: #{pendulum_forward.1} parent=0 // pred_check
    _
  $region7: #{pendulum_forward.1} parent=0 // pred_check_branch
    %13 = sbr.rel (0) target = $region9
  $region8: #{pendulum_forward.1} parent=0 // pred_region
    _
  $region9: #{pendulum_forward.1} parent=0 // pred_fallthru
    _
  // Predicated region
  $region10: #{pendulum_forward.1} parent=0 // pred_check
    _
  $region11: #{pendulum_forward.1} parent=0 // pred_check_branch
    %15 = sbr.rel (0) target = $region13
  $region12: #{pendulum_forward.1} parent=0 // pred_region
    _
  $region13: #{pendulum_forward.1} parent=0 // pred_fallthru
    _
  %v16 = vld [vmem:[%s0] sm:$0xff]
  %v17 = vld [vmem:[%s0 + $0x8] sm:$0xff]
  %v18 = vld [vmem:[%s0 + $0x10] sm:$0xff]
  %v19 = vld [vmem:[%s0 + $0x18] sm:$0xff]
  %v20 = vld [vmem:[%s0 + $0x20] sm:$0xff]
  %v21 = vld [vmem:[%s0 + $0x28] sm:$0xff]
  %v22 = vld [vmem:[%s0 + $0x30] sm:$0xff]
  %v23 = vld [vmem:[%s0 + $0x38] sm:$0xff]
  %v24 = vld [vmem:[%s1] sm:$0xff]
  %v25 = vld [vmem:[%s1 + $0x8] sm:$0xff]
  %v26 = vld [vmem:[%s1 + $0x10] sm:$0xff]
  %v27 = vld [vmem:[%s1 + $0x18] sm:$0xff]
  %v28 = vld [vmem:[%s1 + $0x20] sm:$0xff]
  %v29 = vld [vmem:[%s1 + $0x28] sm:$0xff]
  %v30 = vld [vmem:[%s1 + $0x30] sm:$0xff]
  %v31 = vld [vmem:[%s1 + $0x38] sm:$0xff]
  %v32 = vld [vmem:[%s2] sm:$0xff]
  %v33 = vld [vmem:[%s2 + $0x8] sm:$0xff]
  %v34 = vld [vmem:[%s2 + $0x10] sm:$0xff]
  %v35 = vld [vmem:[%s2 + $0x18] sm:$0xff]
  %v36 = vld [vmem:[%s2 + $0x20] sm:$0xff]
  %v37 = vld [vmem:[%s2 + $0x28] sm:$0xff]
  %v38 = vld [vmem:[%s2 + $0x30] sm:$0xff]
  %v39 = vld [vmem:[%s2 + $0x38] sm:$0xff]
  %v40 = vmax.f32 %v32, -2.0
  %v41 = vmax.f32 %v33, -2.0
  %v42 = vmax.f32 %v34, -2.0
  %v43 = vmax.f32 %v35, -2.0
  %v44 = vmax.f32 %v36, -2.0
  %v45 = vmax.f32 %v37, -2.0
  %v46 = vmax.f32 %v38, -2.0
  %v47 = vmax.f32 %v39, -2.0
  %v48 = vmin.f32 %v40, 2.0
  %v49 = vmin.f32 %v41, 2.0
  %v50 = vmin.f32 %v42, 2.0
  %v51 = vmin.f32 %v43, 2.0
  %v52 = vmin.f32 %v44, 2.0
  %v53 = vmin.f32 %v45, 2.0
  %v54 = vmin.f32 %v46, 2.0
  %v55 = vmin.f32 %v47, 2.0
  %v56 = vand.u32 2147483647, %v16
  %vm57 = vcmp.le.f32.partialorder %v56, 0.7853982
  %vm58 = vcmp.lt.s32.totalorder %v16, 0
  %v59 = vand.u32 %v16, 2139095040
  %v60 = vshrl.u32 %v59, 23
  %v61 = vsub.s32 %v60, 127
  %v62 = vand.u32 2147483647, %v16
  %v63 = vand.u32 %v62, 8388607
  %v64 = vor.u32 %v63, 8388608
  %v65 = vsub.s32 0, %v64
  %v66 = vadd.s32 %v61, 1
  %vm67 = vcmp.gt.s32.totalorder %v66, 0
  %v68 = vsel %vm67, %v66, 0
  %v69 = vshrl.u32 %v68, 5
  %v70 = vand.u32 %v68, 31
  %v71 = vsub.s32 32, %v70
  %v72 = vshrl.u32 683565275, %v71
  %v73 = vshll.u32 683565275, %v70
  %v74 = vshrl.u32 2475754826, %v71
  %v75 = vor.u32 %v73, %v74
  %v76 = vshll.u32 2475754826, %v70
  %v77 = vshrl.u32 2131351028, %v71
  %v78 = vor.u32 %v76, %v77
  %v79 = vshll.u32 2131351028, %v70
  %v80 = vshrl.u32 2102212464, %v71
  %v81 = vor.u32 %v79, %v80
  %v82 = vshll.u32 2102212464, %v70
  %v83 = vshrl.u32 920167782, %v71
  %v84 = vor.u32 %v82, %v83
  %v85 = vshll.u32 920167782, %v70
  %v86 = vshrl.u32 1326507024, %v71
  %v87 = vor.u32 %v85, %v86
  %vm88 = vcmp.lt.s32.totalorder %v69, 1
  %vm89 = vcmp.lt.s32.totalorder %v69, 2
  %vm90 = vcmp.lt.s32.totalorder %v69, 3
  %vm91 = vcmp.lt.s32.totalorder %v69, 4
  %v92 = vsel %vm88, %v72, %v75
  %v93 = vsel %vm91, %v81, 2102212464
  %v94 = vsel %vm90, %v78, %v93
  %v95 = vsel %vm89, %v92, %v94
  %v96 = vsel %vm88, %v75, %v78
  %v97 = vsel %vm91, %v84, 920167782
  %v98 = vsel %vm90, %v81, %v97
  %v99 = vsel %vm89, %v96, %v98
  %v100 = vsel %vm88, %v78, %v81
  %v101 = vsel %vm91, %v87, 1326507024
  %v102 = vsel %vm90, %v84, %v101
  %v103 = vsel %vm89, %v100, %v102
  %v104 = vshll.u32 %v64, 8
  %v105 = vmul.u32.u64.compose %v104, %v103
  %v106 = vextract.low.u32 %v105
  %v107 = vextract.high.u32 %v105
  %v108 = vmul.u32.u64.compose %v104, %v99
  %v109 = vextract.low.u32 %v108
  %v110 = vextract.high.u32 %v108
  %v111 = vmul.u32 %v104, %v95
  %v112 = vadd.s32 %v107, %v109
  %vm113 = vc.u32 %v107, %v109
  %v114 = vadd.s32 %v110, 1
  %v115 = vsel %vm113, %v114, %v110
  %v116 = vadd.s32 %v111, %v115
  %v117 = vadd.s32 %v116, 536870912
  %v118 = vshrl.u32 %v117, 30
  %v119 = vshll.u32 %v118, 30
  %v120 = vsub.s32 %v116, %v119
  %vm121 = vcmp.lt.s32.totalorder %v120, 0
  %v122 = vsub.s32 0, %v120
  %v123 = vsel %vm121, %v122, %v120
  %v124 = vclz %v123
  %v125 = vsub.s32 %v124, 2
  %vm126 = vcmp.gt.s32.totalorder 0, %v125
  %v127 = vsel %vm126, 0, %v125
  %v128 = vsub.s32 32, %v127
  %v129 = vshll.u32 %v120, %v127
  %v130 = vshrl.u32 %v112, %v128
  %v131 = vor.u32 %v129, %v130
  %v132 = vsub.s32 4294967266, %v127
  %v133 = vadd.s32 %v132, 127
  %v134 = vshll.u32 %v133, 23
  %v135 = vor.u32 4788187, %v134
  %v136 = vand.u32 2147483647, %v135
  %v138 = vcvt.s32.f32 %v131
  %v139 = vmul.f32 %v138, %v136
  %v140 = vxor.u32 %v139, 2147483648
  %v141 = vsel %vm58, %v140, %v139
  %v142 = vsub.s32 4, %v118
  %v143 = vsel %vm58, %v142, %v118
  %v144 = vsel %vm57, %v16, %v141
  %v145 = vsel %vm57, 0, %v143
  %v146 = vcosq.f32.pop %v144
  %v147 = vsinq.f32.pop %v144
  %vm148 = vweird.f32 %v16
  %v149 = vadd.s32 %v145, 3
  %v150 = vand.u32 %v149, 3
  %vm151 = vcmp.lt.s32.totalorder %v150, 2
  %vm152 = vcmp.eq.s32.totalorder %v150, 0
  %v153 = vxor.u32 %v147, 2147483648
  %v154 = vsel %vm152, %v146, %v153
  %vm155 = vcmp.eq.s32.totalorder %v150, 2
  %v156 = vxor.u32 %v146, 2147483648
  %v157 = vsel %vm155, %v156, %v147
  %v158 = vsel %vm151, %v154, %v157
  %v159 = vsel %vm148, nan, %v158
  %v160 = vand.u32 2147483647, %v17
  %vm161 = vcmp.le.f32.partialorder %v160, 0.7853982
  %vm162 = vcmp.lt.s32.totalorder %v17, 0
  %v163 = vand.u32 %v17, 2139095040
  %v164 = vshrl.u32 %v163, 23
  %v165 = vsub.s32 %v164, 127
  %v166 = vand.u32 2147483647, %v17
  %v167 = vand.u32 %v166, 8388607
  %v168 = vor.u32 %v167, 8388608
  %v169 = vsub.s32 0, %v168
  %v170 = vadd.s32 %v165, 1
  %vm171 = vcmp.gt.s32.totalorder %v170, 0
  %v172 = vsel %vm171, %v170, 0
  %v173 = vshrl.u32 %v172, 5
  %v174 = vand.u32 %v172, 31
  %v175 = vsub.s32 32, %v174
  %v176 = vshrl.u32 683565275, %v175
  %v177 = vshll.u32 683565275, %v174
  %v178 = vshrl.u32 2475754826, %v175
  %v179 = vor.u32 %v177, %v178
  %v180 = vshll.u32 2475754826, %v174
  %v181 = vshrl.u32 2131351028, %v175
  %v182 = vor.u32 %v180, %v181
  %v183 = vshll.u32 2131351028, %v174
  %v184 = vshrl.u32 2102212464, %v175
  %v185 = vor.u32 %v183, %v184
  %v186 = vshll.u32 2102212464, %v174
  %v187 = vshrl.u32 920167782, %v175
  %v188 = vor.u32 %v186, %v187
  %v189 = vshll.u32 920167782, %v174
  %v190 = vshrl.u32 1326507024, %v175
  %v191 = vor.u32 %v189, %v190
  %vm192 = vcmp.lt.s32.totalorder %v173, 1
  %vm193 = vcmp.lt.s32.totalorder %v173, 2
  %vm194 = vcmp.lt.s32.totalorder %v173, 3
  %vm195 = vcmp.lt.s32.totalorder %v173, 4
  %v196 = vsel %vm192, %v176, %v179
  %v197 = vsel %vm195, %v185, 2102212464
  %v198 = vsel %vm194, %v182, %v197
  %v199 = vsel %vm193, %v196, %v198
  %v200 = vsel %vm192, %v179, %v182
  %v201 = vsel %vm195, %v188, 920167782
  %v202 = vsel %vm194, %v185, %v201
  %v203 = vsel %vm193, %v200, %v202
  %v204 = vsel %vm192, %v182, %v185
  %v205 = vsel %vm195, %v191, 1326507024
  %v206 = vsel %vm194, %v188, %v205
  %v207 = vsel %vm193, %v204, %v206
  %v208 = vshll.u32 %v168, 8
  %v209 = vmul.u32.u64.compose %v208, %v207
  %v210 = vextract.low.u32 %v209
  %v211 = vextract.high.u32 %v209
  %v212 = vmul.u32.u64.compose %v208, %v203
  %v213 = vextract.low.u32 %v212
  %v214 = vextract.high.u32 %v212
  %v215 = vmul.u32 %v208, %v199
  %v216 = vadd.s32 %v211, %v213
  %vm217 = vc.u32 %v211, %v213
  %v218 = vadd.s32 %v214, 1
  %v219 = vsel %vm217, %v218, %v214
  %v220 = vadd.s32 %v215, %v219
  %v221 = vadd.s32 %v220, 536870912
  %v222 = vshrl.u32 %v221, 30
  %v223 = vshll.u32 %v222, 30
  %v224 = vsub.s32 %v220, %v223
  %vm225 = vcmp.lt.s32.totalorder %v224, 0
  %v226 = vsub.s32 0, %v224
  %v227 = vsel %vm225, %v226, %v224
  %v228 = vclz %v227
  %v229 = vsub.s32 %v228, 2
  %vm230 = vcmp.gt.s32.totalorder 0, %v229
  %v231 = vsel %vm230, 0, %v229
  %v232 = vsub.s32 32, %v231
  %v233 = vshll.u32 %v224, %v231
  %v234 = vshrl.u32 %v216, %v232
  %v235 = vor.u32 %v233, %v234
  %v236 = vsub.s32 4294967266, %v231
  %v237 = vadd.s32 %v236, 127
  %v238 = vshll.u32 %v237, 23
  %v239 = vor.u32 4788187, %v238
  %v240 = vand.u32 2147483647, %v239
  %v242 = vcvt.s32.f32 %v235
  %v243 = vmul.f32 %v242, %v240
  %v244 = vxor.u32 %v243, 2147483648
  %v245 = vsel %vm162, %v244, %v243
  %v246 = vsub.s32 4, %v222
  %v247 = vsel %vm162, %v246, %v222
  %v248 = vsel %vm161, %v17, %v245
  %v249 = vsel %vm161, 0, %v247
  %v250 = vcosq.f32.pop %v248
  %v251 = vsinq.f32.pop %v248
  %vm252 = vweird.f32 %v17
  %v253 = vadd.s32 %v249, 3
  %v254 = vand.u32 %v253, 3
  %vm255 = vcmp.lt.s32.totalorder %v254, 2
  %vm256 = vcmp.eq.s32.totalorder %v254, 0
  %v257 = vxor.u32 %v251, 2147483648
  %v258 = vsel %vm256, %v250, %v257
  %vm259 = vcmp.eq.s32.totalorder %v254, 2
  %v260 = vxor.u32 %v250, 2147483648
  %v261 = vsel %vm259, %v260, %v251
  %v262 = vsel %vm255, %v258, %v261
  %v263 = vsel %vm252, nan, %v262
  %v264 = vand.u32 2147483647, %v18
  %vm265 = vcmp.le.f32.partialorder %v264, 0.7853982
  %vm266 = vcmp.lt.s32.totalorder %v18, 0
  %v267 = vand.u32 %v18, 2139095040
  %v268 = vshrl.u32 %v267, 23
  %v269 = vsub.s32 %v268, 127
  %v270 = vand.u32 2147483647, %v18
  %v271 = vand.u32 %v270, 8388607
  %v272 = vor.u32 %v271, 8388608
  %v273 = vsub.s32 0, %v272
  %v274 = vadd.s32 %v269, 1
  %vm275 = vcmp.gt.s32.totalorder %v274, 0
  %v276 = vsel %vm275, %v274, 0
  %v277 = vshrl.u32 %v276, 5
  %v278 = vand.u32 %v276, 31
  %v279 = vsub.s32 32, %v278
  %v280 = vshrl.u32 683565275, %v279
  %v281 = vshll.u32 683565275, %v278
  %v282 = vshrl.u32 2475754826, %v279
  %v283 = vor.u32 %v281, %v282
  %v284 = vshll.u32 2475754826, %v278
  %v285 = vshrl.u32 2131351028, %v279
  %v286 = vor.u32 %v284, %v285
  %v287 = vshll.u32 2131351028, %v278
  %v288 = vshrl.u32 2102212464, %v279
  %v289 = vor.u32 %v287, %v288
  %v290 = vshll.u32 2102212464, %v278
  %v291 = vshrl.u32 920167782, %v279
  %v292 = vor.u32 %v290, %v291
  %v293 = vshll.u32 920167782, %v278
  %v294 = vshrl.u32 1326507024, %v279
  %v295 = vor.u32 %v293, %v294
  %vm296 = vcmp.lt.s32.totalorder %v277, 1
  %vm297 = vcmp.lt.s32.totalorder %v277, 2
  %vm298 = vcmp.lt.s32.totalorder %v277, 3
  %vm299 = vcmp.lt.s32.totalorder %v277, 4
  %v300 = vsel %vm296, %v280, %v283
  %v301 = vsel %vm299, %v289, 2102212464
  %v302 = vsel %vm298, %v286, %v301
  %v303 = vsel %vm297, %v300, %v302
  %v304 = vsel %vm296, %v283, %v286
  %v305 = vsel %vm299, %v292, 920167782
  %v306 = vsel %vm298, %v289, %v305
  %v307 = vsel %vm297, %v304, %v306
  %v308 = vsel %vm296, %v286, %v289
  %v309 = vsel %vm299, %v295, 1326507024
  %v310 = vsel %vm298, %v292, %v309
  %v311 = vsel %vm297, %v308, %v310
  %v312 = vshll.u32 %v272, 8
  %v313 = vmul.u32.u64.compose %v312, %v311
  %v314 = vextract.low.u32 %v313
  %v315 = vextract.high.u32 %v313
  %v316 = vmul.u32.u64.compose %v312, %v307
  %v317 = vextract.low.u32 %v316
  %v318 = vextract.high.u32 %v316
  %v319 = vmul.u32 %v312, %v303
  %v320 = vadd.s32 %v315, %v317
  %vm321 = vc.u32 %v315, %v317
  %v322 = vadd.s32 %v318, 1
  %v323 = vsel %vm321, %v322, %v318
  %v324 = vadd.s32 %v319, %v323
  %v325 = vadd.s32 %v324, 536870912
  %v326 = vshrl.u32 %v325, 30
  %v327 = vshll.u32 %v326, 30
  %v328 = vsub.s32 %v324, %v327
  %vm329 = vcmp.lt.s32.totalorder %v328, 0
  %v330 = vsub.s32 0, %v328
  %v331 = vsel %vm329, %v330, %v328
  %v332 = vclz %v331
  %v333 = vsub.s32 %v332, 2
  %vm334 = vcmp.gt.s32.totalorder 0, %v333
  %v335 = vsel %vm334, 0, %v333
  %v336 = vsub.s32 32, %v335
  %v337 = vshll.u32 %v328, %v335
  %v338 = vshrl.u32 %v320, %v336
  %v339 = vor.u32 %v337, %v338
  %v340 = vsub.s32 4294967266, %v335
  %v341 = vadd.s32 %v340, 127
  %v342 = vshll.u32 %v341, 23
  %v343 = vor.u32 4788187, %v342
  %v344 = vand.u32 2147483647, %v343
  %v346 = vcvt.s32.f32 %v339
  %v347 = vmul.f32 %v346, %v344
  %v348 = vxor.u32 %v347, 2147483648
  %v349 = vsel %vm266, %v348, %v347
  %v350 = vsub.s32 4, %v326
  %v351 = vsel %vm266, %v350, %v326
  %v352 = vsel %vm265, %v18, %v349
  %v353 = vsel %vm265, 0, %v351
  %v354 = vcosq.f32.pop %v352
  %v355 = vsinq.f32.pop %v352
  %vm356 = vweird.f32 %v18
  %v357 = vadd.s32 %v353, 3
  %v358 = vand.u32 %v357, 3
  %vm359 = vcmp.lt.s32.totalorder %v358, 2
  %vm360 = vcmp.eq.s32.totalorder %v358, 0
  %v361 = vxor.u32 %v355, 2147483648
  %v362 = vsel %vm360, %v354, %v361
  %vm363 = vcmp.eq.s32.totalorder %v358, 2
  %v364 = vxor.u32 %v354, 2147483648
  %v365 = vsel %vm363, %v364, %v355
  %v366 = vsel %vm359, %v362, %v365
  %v367 = vsel %vm356, nan, %v366
  %v368 = vand.u32 2147483647, %v19
  %vm369 = vcmp.le.f32.partialorder %v368, 0.7853982
  %vm370 = vcmp.lt.s32.totalorder %v19, 0
  %v371 = vand.u32 %v19, 2139095040
  %v372 = vshrl.u32 %v371, 23
  %v373 = vsub.s32 %v372, 127
  %v374 = vand.u32 2147483647, %v19
  %v375 = vand.u32 %v374, 8388607
  %v376 = vor.u32 %v375, 8388608
  %v377 = vsub.s32 0, %v376
  %v378 = vadd.s32 %v373, 1
  %vm379 = vcmp.gt.s32.totalorder %v378, 0
  %v380 = vsel %vm379, %v378, 0
  %v381 = vshrl.u32 %v380, 5
  %v382 = vand.u32 %v380, 31
  %v383 = vsub.s32 32, %v382
  %v384 = vshrl.u32 683565275, %v383
  %v385 = vshll.u32 683565275, %v382
  %v386 = vshrl.u32 2475754826, %v383
  %v387 = vor.u32 %v385, %v386
  %v388 = vshll.u32 2475754826, %v382
  %v389 = vshrl.u32 2131351028, %v383
  %v390 = vor.u32 %v388, %v389
  %v391 = vshll.u32 2131351028, %v382
  %v392 = vshrl.u32 2102212464, %v383
  %v393 = vor.u32 %v391, %v392
  %v394 = vshll.u32 2102212464, %v382
  %v395 = vshrl.u32 920167782, %v383
  %v396 = vor.u32 %v394, %v395
  %v397 = vshll.u32 920167782, %v382
  %v398 = vshrl.u32 1326507024, %v383
  %v399 = vor.u32 %v397, %v398
  %vm400 = vcmp.lt.s32.totalorder %v381, 1
  %vm401 = vcmp.lt.s32.totalorder %v381, 2
  %vm402 = vcmp.lt.s32.totalorder %v381, 3
  %vm403 = vcmp.lt.s32.totalorder %v381, 4
  %v404 = vsel %vm400, %v384, %v387
  %v405 = vsel %vm403, %v393, 2102212464
  %v406 = vsel %vm402, %v390, %v405
  %v407 = vsel %vm401, %v404, %v406
  %v408 = vsel %vm400, %v387, %v390
  %v409 = vsel %vm403, %v396, 920167782
  %v410 = vsel %vm402, %v393, %v409
  %v411 = vsel %vm401, %v408, %v410
  %v412 = vsel %vm400, %v390, %v393
  %v413 = vsel %vm403, %v399, 1326507024
  %v414 = vsel %vm402, %v396, %v413
  %v415 = vsel %vm401, %v412, %v414
  %v416 = vshll.u32 %v376, 8
  %v417 = vmul.u32.u64.compose %v416, %v415
  %v418 = vextract.low.u32 %v417
  %v419 = vextract.high.u32 %v417
  %v420 = vmul.u32.u64.compose %v416, %v411
  %v421 = vextract.low.u32 %v420
  %v422 = vextract.high.u32 %v420
  %v423 = vmul.u32 %v416, %v407
  %v424 = vadd.s32 %v419, %v421
  %vm425 = vc.u32 %v419, %v421
  %v426 = vadd.s32 %v422, 1
  %v427 = vsel %vm425, %v426, %v422
  %v428 = vadd.s32 %v423, %v427
  %v429 = vadd.s32 %v428, 536870912
  %v430 = vshrl.u32 %v429, 30
  %v431 = vshll.u32 %v430, 30
  %v432 = vsub.s32 %v428, %v431
  %vm433 = vcmp.lt.s32.totalorder %v432, 0
  %v434 = vsub.s32 0, %v432
  %v435 = vsel %vm433, %v434, %v432
  %v436 = vclz %v435
  %v437 = vsub.s32 %v436, 2
  %vm438 = vcmp.gt.s32.totalorder 0, %v437
  %v439 = vsel %vm438, 0, %v437
  %v440 = vsub.s32 32, %v439
  %v441 = vshll.u32 %v432, %v439
  %v442 = vshrl.u32 %v424, %v440
  %v443 = vor.u32 %v441, %v442
  %v444 = vsub.s32 4294967266, %v439
  %v445 = vadd.s32 %v444, 127
  %v446 = vshll.u32 %v445, 23
  %v447 = vor.u32 4788187, %v446
  %v448 = vand.u32 2147483647, %v447
  %v450 = vcvt.s32.f32 %v443
  %v451 = vmul.f32 %v450, %v448
  %v452 = vxor.u32 %v451, 2147483648
  %v453 = vsel %vm370, %v452, %v451
  %v454 = vsub.s32 4, %v430
  %v455 = vsel %vm370, %v454, %v430
  %v456 = vsel %vm369, %v19, %v453
  %v457 = vsel %vm369, 0, %v455
  %v458 = vcosq.f32.pop %v456
  %v459 = vsinq.f32.pop %v456
  %vm460 = vweird.f32 %v19
  %v461 = vadd.s32 %v457, 3
  %v462 = vand.u32 %v461, 3
  %vm463 = vcmp.lt.s32.totalorder %v462, 2
  %vm464 = vcmp.eq.s32.totalorder %v462, 0
  %v465 = vxor.u32 %v459, 2147483648
  %v466 = vsel %vm464, %v458, %v465
  %vm467 = vcmp.eq.s32.totalorder %v462, 2
  %v468 = vxor.u32 %v458, 2147483648
  %v469 = vsel %vm467, %v468, %v459
  %v470 = vsel %vm463, %v466, %v469
  %v471 = vsel %vm460, nan, %v470
  %v472 = vand.u32 2147483647, %v20
  %vm473 = vcmp.le.f32.partialorder %v472, 0.7853982
  %vm474 = vcmp.lt.s32.totalorder %v20, 0
  %v475 = vand.u32 %v20, 2139095040
  %v476 = vshrl.u32 %v475, 23
  %v477 = vsub.s32 %v476, 127
  %v478 = vand.u32 2147483647, %v20
  %v479 = vand.u32 %v478, 8388607
  %v480 = vor.u32 %v479, 8388608
  %v481 = vsub.s32 0, %v480
  %v482 = vadd.s32 %v477, 1
  %vm483 = vcmp.gt.s32.totalorder %v482, 0
  %v484 = vsel %vm483, %v482, 0
  %v485 = vshrl.u32 %v484, 5
  %v486 = vand.u32 %v484, 31
  %v487 = vsub.s32 32, %v486
  %v488 = vshrl.u32 683565275, %v487
  %v489 = vshll.u32 683565275, %v486
  %v490 = vshrl.u32 2475754826, %v487
  %v491 = vor.u32 %v489, %v490
  %v492 = vshll.u32 2475754826, %v486
  %v493 = vshrl.u32 2131351028, %v487
  %v494 = vor.u32 %v492, %v493
  %v495 = vshll.u32 2131351028, %v486
  %v496 = vshrl.u32 2102212464, %v487
  %v497 = vor.u32 %v495, %v496
  %v498 = vshll.u32 2102212464, %v486
  %v499 = vshrl.u32 920167782, %v487
  %v500 = vor.u32 %v498, %v499
  %v501 = vshll.u32 920167782, %v486
  %v502 = vshrl.u32 1326507024, %v487
  %v503 = vor.u32 %v501, %v502
  %vm504 = vcmp.lt.s32.totalorder %v485, 1
  %vm505 = vcmp.lt.s32.totalorder %v485, 2
  %vm506 = vcmp.lt.s32.totalorder %v485, 3
  %vm507 = vcmp.lt.s32.totalorder %v485, 4
  %v508 = vsel %vm504, %v488, %v491
  %v509 = vsel %vm507, %v497, 2102212464
  %v510 = vsel %vm506, %v494, %v509
  %v511 = vsel %vm505, %v508, %v510
  %v512 = vsel %vm504, %v491, %v494
  %v513 = vsel %vm507, %v500, 920167782
  %v514 = vsel %vm506, %v497, %v513
  %v515 = vsel %vm505, %v512, %v514
  %v516 = vsel %vm504, %v494, %v497
  %v517 = vsel %vm507, %v503, 1326507024
  %v518 = vsel %vm506, %v500, %v517
  %v519 = vsel %vm505, %v516, %v518
  %v520 = vshll.u32 %v480, 8
  %v521 = vmul.u32.u64.compose %v520, %v519
  %v522 = vextract.low.u32 %v521
  %v523 = vextract.high.u32 %v521
  %v524 = vmul.u32.u64.compose %v520, %v515
  %v525 = vextract.low.u32 %v524
  %v526 = vextract.high.u32 %v524
  %v527 = vmul.u32 %v520, %v511
  %v528 = vadd.s32 %v523, %v525
  %vm529 = vc.u32 %v523, %v525
  %v530 = vadd.s32 %v526, 1
  %v531 = vsel %vm529, %v530, %v526
  %v532 = vadd.s32 %v527, %v531
  %v533 = vadd.s32 %v532, 536870912
  %v534 = vshrl.u32 %v533, 30
  %v535 = vshll.u32 %v534, 30
  %v536 = vsub.s32 %v532, %v535
  %vm537 = vcmp.lt.s32.totalorder %v536, 0
  %v538 = vsub.s32 0, %v536
  %v539 = vsel %vm537, %v538, %v536
  %v540 = vclz %v539
  %v541 = vsub.s32 %v540, 2
  %vm542 = vcmp.gt.s32.totalorder 0, %v541
  %v543 = vsel %vm542, 0, %v541
  %v544 = vsub.s32 32, %v543
  %v545 = vshll.u32 %v536, %v543
  %v546 = vshrl.u32 %v528, %v544
  %v547 = vor.u32 %v545, %v546
  %v548 = vsub.s32 4294967266, %v543
  %v549 = vadd.s32 %v548, 127
  %v550 = vshll.u32 %v549, 23
  %v551 = vor.u32 4788187, %v550
  %v552 = vand.u32 2147483647, %v551
  %v554 = vcvt.s32.f32 %v547
  %v555 = vmul.f32 %v554, %v552
  %v556 = vxor.u32 %v555, 2147483648
  %v557 = vsel %vm474, %v556, %v555
  %v558 = vsub.s32 4, %v534
  %v559 = vsel %vm474, %v558, %v534
  %v560 = vsel %vm473, %v20, %v557
  %v561 = vsel %vm473, 0, %v559
  %v562 = vcosq.f32.pop %v560
  %v563 = vsinq.f32.pop %v560
  %vm564 = vweird.f32 %v20
  %v565 = vadd.s32 %v561, 3
  %v566 = vand.u32 %v565, 3
  %vm567 = vcmp.lt.s32.totalorder %v566, 2
  %vm568 = vcmp.eq.s32.totalorder %v566, 0
  %v569 = vxor.u32 %v563, 2147483648
  %v570 = vsel %vm568, %v562, %v569
  %vm571 = vcmp.eq.s32.totalorder %v566, 2
  %v572 = vxor.u32 %v562, 2147483648
  %v573 = vsel %vm571, %v572, %v563
  %v574 = vsel %vm567, %v570, %v573
  %v575 = vsel %vm564, nan, %v574
  %v576 = vand.u32 2147483647, %v21
  %vm577 = vcmp.le.f32.partialorder %v576, 0.7853982
  %vm578 = vcmp.lt.s32.totalorder %v21, 0
  %v579 = vand.u32 %v21, 2139095040
  %v580 = vshrl.u32 %v579, 23
  %v581 = vsub.s32 %v580, 127
  %v582 = vand.u32 2147483647, %v21
  %v583 = vand.u32 %v582, 8388607
  %v584 = vor.u32 %v583, 8388608
  %v585 = vsub.s32 0, %v584
  %v586 = vadd.s32 %v581, 1
  %vm587 = vcmp.gt.s32.totalorder %v586, 0
  %v588 = vsel %vm587, %v586, 0
  %v589 = vshrl.u32 %v588, 5
  %v590 = vand.u32 %v588, 31
  %v591 = vsub.s32 32, %v590
  %v592 = vshrl.u32 683565275, %v591
  %v593 = vshll.u32 683565275, %v590
  %v594 = vshrl.u32 2475754826, %v591
  %v595 = vor.u32 %v593, %v594
  %v596 = vshll.u32 2475754826, %v590
  %v597 = vshrl.u32 2131351028, %v591
  %v598 = vor.u32 %v596, %v597
  %v599 = vshll.u32 2131351028, %v590
  %v600 = vshrl.u32 2102212464, %v591
  %v601 = vor.u32 %v599, %v600
  %v602 = vshll.u32 2102212464, %v590
  %v603 = vshrl.u32 920167782, %v591
  %v604 = vor.u32 %v602, %v603
  %v605 = vshll.u32 920167782, %v590
  %v606 = vshrl.u32 1326507024, %v591
  %v607 = vor.u32 %v605, %v606
  %vm608 = vcmp.lt.s32.totalorder %v589, 1
  %vm609 = vcmp.lt.s32.totalorder %v589, 2
  %vm610 = vcmp.lt.s32.totalorder %v589, 3
  %vm611 = vcmp.lt.s32.totalorder %v589, 4
  %v612 = vsel %vm608, %v592, %v595
  %v613 = vsel %vm611, %v601, 2102212464
  %v614 = vsel %vm610, %v598, %v613
  %v615 = vsel %vm609, %v612, %v614
  %v616 = vsel %vm608, %v595, %v598
  %v617 = vsel %vm611, %v604, 920167782
  %v618 = vsel %vm610, %v601, %v617
  %v619 = vsel %vm609, %v616, %v618
  %v620 = vsel %vm608, %v598, %v601
  %v621 = vsel %vm611, %v607, 1326507024
  %v622 = vsel %vm610, %v604, %v621
  %v623 = vsel %vm609, %v620, %v622
  %v624 = vshll.u32 %v584, 8
  %v625 = vmul.u32.u64.compose %v624, %v623
  %v626 = vextract.low.u32 %v625
  %v627 = vextract.high.u32 %v625
  %v628 = vmul.u32.u64.compose %v624, %v619
  %v629 = vextract.low.u32 %v628
  %v630 = vextract.high.u32 %v628
  %v631 = vmul.u32 %v624, %v615
  %v632 = vadd.s32 %v627, %v629
  %vm633 = vc.u32 %v627, %v629
  %v634 = vadd.s32 %v630, 1
  %v635 = vsel %vm633, %v634, %v630
  %v636 = vadd.s32 %v631, %v635
  %v637 = vadd.s32 %v636, 536870912
  %v638 = vshrl.u32 %v637, 30
  %v639 = vshll.u32 %v638, 30
  %v640 = vsub.s32 %v636, %v639
  %vm641 = vcmp.lt.s32.totalorder %v640, 0
  %v642 = vsub.s32 0, %v640
  %v643 = vsel %vm641, %v642, %v640
  %v644 = vclz %v643
  %v645 = vsub.s32 %v644, 2
  %vm646 = vcmp.gt.s32.totalorder 0, %v645
  %v647 = vsel %vm646, 0, %v645
  %v648 = vsub.s32 32, %v647
  %v649 = vshll.u32 %v640, %v647
  %v650 = vshrl.u32 %v632, %v648
  %v651 = vor.u32 %v649, %v650
  %v652 = vsub.s32 4294967266, %v647
  %v653 = vadd.s32 %v652, 127
  %v654 = vshll.u32 %v653, 23
  %v655 = vor.u32 4788187, %v654
  %v656 = vand.u32 2147483647, %v655
  %v658 = vcvt.s32.f32 %v651
  %v659 = vmul.f32 %v658, %v656
  %v660 = vxor.u32 %v659, 2147483648
  %v661 = vsel %vm578, %v660, %v659
  %v662 = vsub.s32 4, %v638
  %v663 = vsel %vm578, %v662, %v638
  %v664 = vsel %vm577, %v21, %v661
  %v665 = vsel %vm577, 0, %v663
  %v666 = vcosq.f32.pop %v664
  %v667 = vsinq.f32.pop %v664
  %vm668 = vweird.f32 %v21
  %v669 = vadd.s32 %v665, 3
  %v670 = vand.u32 %v669, 3
  %vm671 = vcmp.lt.s32.totalorder %v670, 2
  %vm672 = vcmp.eq.s32.totalorder %v670, 0
  %v673 = vxor.u32 %v667, 2147483648
  %v674 = vsel %vm672, %v666, %v673
  %vm675 = vcmp.eq.s32.totalorder %v670, 2
  %v676 = vxor.u32 %v666, 2147483648
  %v677 = vsel %vm675, %v676, %v667
  %v678 = vsel %vm671, %v674, %v677
  %v679 = vsel %vm668, nan, %v678
  %v680 = vand.u32 2147483647, %v22
  %vm681 = vcmp.le.f32.partialorder %v680, 0.7853982
  %vm682 = vcmp.lt.s32.totalorder %v22, 0
  %v683 = vand.u32 %v22, 2139095040
  %v684 = vshrl.u32 %v683, 23
  %v685 = vsub.s32 %v684, 127
  %v686 = vand.u32 2147483647, %v22
  %v687 = vand.u32 %v686, 8388607
  %v688 = vor.u32 %v687, 8388608
  %v689 = vsub.s32 0, %v688
  %v690 = vadd.s32 %v685, 1
  %vm691 = vcmp.gt.s32.totalorder %v690, 0
  %v692 = vsel %vm691, %v690, 0
  %v693 = vshrl.u32 %v692, 5
  %v694 = vand.u32 %v692, 31
  %v695 = vsub.s32 32, %v694
  %v696 = vshrl.u32 683565275, %v695
  %v697 = vshll.u32 683565275, %v694
  %v698 = vshrl.u32 2475754826, %v695
  %v699 = vor.u32 %v697, %v698
  %v700 = vshll.u32 2475754826, %v694
  %v701 = vshrl.u32 2131351028, %v695
  %v702 = vor.u32 %v700, %v701
  %v703 = vshll.u32 2131351028, %v694
  %v704 = vshrl.u32 2102212464, %v695
  %v705 = vor.u32 %v703, %v704
  %v706 = vshll.u32 2102212464, %v694
  %v707 = vshrl.u32 920167782, %v695
  %v708 = vor.u32 %v706, %v707
  %v709 = vshll.u32 920167782, %v694
  %v710 = vshrl.u32 1326507024, %v695
  %v711 = vor.u32 %v709, %v710
  %vm712 = vcmp.lt.s32.totalorder %v693, 1
  %vm713 = vcmp.lt.s32.totalorder %v693, 2
  %vm714 = vcmp.lt.s32.totalorder %v693, 3
  %vm715 = vcmp.lt.s32.totalorder %v693, 4
  %v716 = vsel %vm712, %v696, %v699
  %v717 = vsel %vm715, %v705, 2102212464
  %v718 = vsel %vm714, %v702, %v717
  %v719 = vsel %vm713, %v716, %v718
  %v720 = vsel %vm712, %v699, %v702
  %v721 = vsel %vm715, %v708, 920167782
  %v722 = vsel %vm714, %v705, %v721
  %v723 = vsel %vm713, %v720, %v722
  %v724 = vsel %vm712, %v702, %v705
  %v725 = vsel %vm715, %v711, 1326507024
  %v726 = vsel %vm714, %v708, %v725
  %v727 = vsel %vm713, %v724, %v726
  %v728 = vshll.u32 %v688, 8
  %v729 = vmul.u32.u64.compose %v728, %v727
  %v730 = vextract.low.u32 %v729
  %v731 = vextract.high.u32 %v729
  %v732 = vmul.u32.u64.compose %v728, %v723
  %v733 = vextract.low.u32 %v732
  %v734 = vextract.high.u32 %v732
  %v735 = vmul.u32 %v728, %v719
  %v736 = vadd.s32 %v731, %v733
  %vm737 = vc.u32 %v731, %v733
  %v738 = vadd.s32 %v734, 1
  %v739 = vsel %vm737, %v738, %v734
  %v740 = vadd.s32 %v735, %v739
  %v741 = vadd.s32 %v740, 536870912
  %v742 = vshrl.u32 %v741, 30
  %v743 = vshll.u32 %v742, 30
  %v744 = vsub.s32 %v740, %v743
  %vm745 = vcmp.lt.s32.totalorder %v744, 0
  %v746 = vsub.s32 0, %v744
  %v747 = vsel %vm745, %v746, %v744
  %v748 = vclz %v747
  %v749 = vsub.s32 %v748, 2
  %vm750 = vcmp.gt.s32.totalorder 0, %v749
  %v751 = vsel %vm750, 0, %v749
  %v752 = vsub.s32 32, %v751
  %v753 = vshll.u32 %v744, %v751
  %v754 = vshrl.u32 %v736, %v752
  %v755 = vor.u32 %v753, %v754
  %v756 = vsub.s32 4294967266, %v751
  %v757 = vadd.s32 %v756, 127
  %v758 = vshll.u32 %v757, 23
  %v759 = vor.u32 4788187, %v758
  %v760 = vand.u32 2147483647, %v759
  %v762 = vcvt.s32.f32 %v755
  %v763 = vmul.f32 %v762, %v760
  %v764 = vxor.u32 %v763, 2147483648
  %v765 = vsel %vm682, %v764, %v763
  %v766 = vsub.s32 4, %v742
  %v767 = vsel %vm682, %v766, %v742
  %v768 = vsel %vm681, %v22, %v765
  %v769 = vsel %vm681, 0, %v767
  %v770 = vcosq.f32.pop %v768
  %v771 = vsinq.f32.pop %v768
  %vm772 = vweird.f32 %v22
  %v773 = vadd.s32 %v769, 3
  %v774 = vand.u32 %v773, 3
  %vm775 = vcmp.lt.s32.totalorder %v774, 2
  %vm776 = vcmp.eq.s32.totalorder %v774, 0
  %v777 = vxor.u32 %v771, 2147483648
  %v778 = vsel %vm776, %v770, %v777
  %vm779 = vcmp.eq.s32.totalorder %v774, 2
  %v780 = vxor.u32 %v770, 2147483648
  %v781 = vsel %vm779, %v780, %v771
  %v782 = vsel %vm775, %v778, %v781
  %v783 = vsel %vm772, nan, %v782
  %v784 = vand.u32 2147483647, %v23
  %vm785 = vcmp.le.f32.partialorder %v784, 0.7853982
  %vm786 = vcmp.lt.s32.totalorder %v23, 0
  %v787 = vand.u32 %v23, 2139095040
  %v788 = vshrl.u32 %v787, 23
  %v789 = vsub.s32 %v788, 127
  %v790 = vand.u32 2147483647, %v23
  %v791 = vand.u32 %v790, 8388607
  %v792 = vor.u32 %v791, 8388608
  %v793 = vsub.s32 0, %v792
  %v794 = vadd.s32 %v789, 1
  %vm795 = vcmp.gt.s32.totalorder %v794, 0
  %v796 = vsel %vm795, %v794, 0
  %v797 = vshrl.u32 %v796, 5
  %v798 = vand.u32 %v796, 31
  %v799 = vsub.s32 32, %v798
  %v800 = vshrl.u32 683565275, %v799
  %v801 = vshll.u32 683565275, %v798
  %v802 = vshrl.u32 2475754826, %v799
  %v803 = vor.u32 %v801, %v802
  %v804 = vshll.u32 2475754826, %v798
  %v805 = vshrl.u32 2131351028, %v799
  %v806 = vor.u32 %v804, %v805
  %v807 = vshll.u32 2131351028, %v798
  %v808 = vshrl.u32 2102212464, %v799
  %v809 = vor.u32 %v807, %v808
  %v810 = vshll.u32 2102212464, %v798
  %v811 = vshrl.u32 920167782, %v799
  %v812 = vor.u32 %v810, %v811
  %v813 = vshll.u32 920167782, %v798
  %v814 = vshrl.u32 1326507024, %v799
  %v815 = vor.u32 %v813, %v814
  %vm816 = vcmp.lt.s32.totalorder %v797, 1
  %vm817 = vcmp.lt.s32.totalorder %v797, 2
  %vm818 = vcmp.lt.s32.totalorder %v797, 3
  %vm819 = vcmp.lt.s32.totalorder %v797, 4
  %v820 = vsel %vm816, %v800, %v803
  %v821 = vsel %vm819, %v809, 2102212464
  %v822 = vsel %vm818, %v806, %v821
  %v823 = vsel %vm817, %v820, %v822
  %v824 = vsel %vm816, %v803, %v806
  %v825 = vsel %vm819, %v812, 920167782
  %v826 = vsel %vm818, %v809, %v825
  %v827 = vsel %vm817, %v824, %v826
  %v828 = vsel %vm816, %v806, %v809
  %v829 = vsel %vm819, %v815, 1326507024
  %v830 = vsel %vm818, %v812, %v829
  %v831 = vsel %vm817, %v828, %v830
  %v832 = vshll.u32 %v792, 8
  %v833 = vmul.u32.u64.compose %v832, %v831
  %v834 = vextract.low.u32 %v833
  %v835 = vextract.high.u32 %v833
  %v836 = vmul.u32.u64.compose %v832, %v827
  %v837 = vextract.low.u32 %v836
  %v838 = vextract.high.u32 %v836
  %v839 = vmul.u32 %v832, %v823
  %v840 = vadd.s32 %v835, %v837
  %vm841 = vc.u32 %v835, %v837
  %v842 = vadd.s32 %v838, 1
  %v843 = vsel %vm841, %v842, %v838
  %v844 = vadd.s32 %v839, %v843
  %v845 = vadd.s32 %v844, 536870912
  %v846 = vshrl.u32 %v845, 30
  %v847 = vshll.u32 %v846, 30
  %v848 = vsub.s32 %v844, %v847
  %vm849 = vcmp.lt.s32.totalorder %v848, 0
  %v850 = vsub.s32 0, %v848
  %v851 = vsel %vm849, %v850, %v848
  %v852 = vclz %v851
  %v853 = vsub.s32 %v852, 2
  %vm854 = vcmp.gt.s32.totalorder 0, %v853
  %v855 = vsel %vm854, 0, %v853
  %v856 = vsub.s32 32, %v855
  %v857 = vshll.u32 %v848, %v855
  %v858 = vshrl.u32 %v840, %v856
  %v859 = vor.u32 %v857, %v858
  %v860 = vsub.s32 4294967266, %v855
  %v861 = vadd.s32 %v860, 127
  %v862 = vshll.u32 %v861, 23
  %v863 = vor.u32 4788187, %v862
  %v864 = vand.u32 2147483647, %v863
  %v866 = vcvt.s32.f32 %v859
  %v867 = vmul.f32 %v866, %v864
  %v868 = vxor.u32 %v867, 2147483648
  %v869 = vsel %vm786, %v868, %v867
  %v870 = vsub.s32 4, %v846
  %v871 = vsel %vm786, %v870, %v846
  %v872 = vsel %vm785, %v23, %v869
  %v873 = vsel %vm785, 0, %v871
  %v874 = vcosq.f32.pop %v872
  %v875 = vsinq.f32.pop %v872
  %vm876 = vweird.f32 %v23
  %v877 = vadd.s32 %v873, 3
  %v878 = vand.u32 %v877, 3
  %vm879 = vcmp.lt.s32.totalorder %v878, 2
  %vm880 = vcmp.eq.s32.totalorder %v878, 0
  %v881 = vxor.u32 %v875, 2147483648
  %v882 = vsel %vm880, %v874, %v881
  %vm883 = vcmp.eq.s32.totalorder %v878, 2
  %v884 = vxor.u32 %v874, 2147483648
  %v885 = vsel %vm883, %v884, %v875
  %v886 = vsel %vm879, %v882, %v885
  %v887 = vsel %vm876, nan, %v886
  %v888 = vmul.f32 %v159, 15.0
  %v889 = vmul.f32 %v263, 15.0
  %v890 = vmul.f32 %v367, 15.0
  %v891 = vmul.f32 %v471, 15.0
  %v892 = vmul.f32 %v575, 15.0
  %v893 = vmul.f32 %v679, 15.0
  %v894 = vmul.f32 %v783, 15.0
  %v895 = vmul.f32 %v887, 15.0
  %v896 = vmul.f32 %v48, 3.0
  %v897 = vmul.f32 %v49, 3.0
  %v898 = vmul.f32 %v50, 3.0
  %v899 = vmul.f32 %v51, 3.0
  %v900 = vmul.f32 %v52, 3.0
  %v901 = vmul.f32 %v53, 3.0
  %v902 = vmul.f32 %v54, 3.0
  %v903 = vmul.f32 %v55, 3.0
  %v904 = vadd.f32 %v888, %v896
  %v905 = vadd.f32 %v889, %v897
  %v906 = vadd.f32 %v890, %v898
  %v907 = vadd.f32 %v891, %v899
  %v908 = vadd.f32 %v892, %v900
  %v909 = vadd.f32 %v893, %v901
  %v910 = vadd.f32 %v894, %v902
  %v911 = vadd.f32 %v895, %v903
  %v912 = vmul.f32 %v904, 0.05
  %v913 = vmul.f32 %v905, 0.05
  %v914 = vmul.f32 %v906, 0.05
  %v915 = vmul.f32 %v907, 0.05
  %v916 = vmul.f32 %v908, 0.05
  %v917 = vmul.f32 %v909, 0.05
  %v918 = vmul.f32 %v910, 0.05
  %v919 = vmul.f32 %v911, 0.05
  %v920 = vadd.f32 %v24, %v912
  %v921 = vadd.f32 %v25, %v913
  %v922 = vadd.f32 %v26, %v914
  %v923 = vadd.f32 %v27, %v915
  %v924 = vadd.f32 %v28, %v916
  %v925 = vadd.f32 %v29, %v917
  %v926 = vadd.f32 %v30, %v918
  %v927 = vadd.f32 %v31, %v919
  %v928 = vmax.f32 %v920, -8.0
  %v929 = vmax.f32 %v921, -8.0
  %v930 = vmax.f32 %v922, -8.0
  %v931 = vmax.f32 %v923, -8.0
  %v932 = vmax.f32 %v924, -8.0
  %v933 = vmax.f32 %v925, -8.0
  %v934 = vmax.f32 %v926, -8.0
  %v935 = vmax.f32 %v927, -8.0
  %v936 = vmin.f32 %v928, 8.0
  %v937 = vmin.f32 %v929, 8.0
  %v938 = vmin.f32 %v930, 8.0
  %v939 = vmin.f32 %v931, 8.0
  %v940 = vmin.f32 %v932, 8.0
  %v941 = vmin.f32 %v933, 8.0
  %v942 = vmin.f32 %v934, 8.0
  %v943 = vmin.f32 %v935, 8.0
  %v944 = vmul.f32 %v936, 0.05
  %v945 = vmul.f32 %v937, 0.05
  %v946 = vmul.f32 %v938, 0.05
  %v947 = vmul.f32 %v939, 0.05
  %v948 = vmul.f32 %v940, 0.05
  %v949 = vmul.f32 %v941, 0.05
  %v950 = vmul.f32 %v942, 0.05
  %v951 = vmul.f32 %v943, 0.05
  %v952 = vadd.f32 %v16, %v944
  %v953 = vadd.f32 %v17, %v945
  %v954 = vadd.f32 %v18, %v946
  %v955 = vadd.f32 %v19, %v947
  %v956 = vadd.f32 %v20, %v948
  %v957 = vadd.f32 %v21, %v949
  %v958 = vadd.f32 %v22, %v950
  %v959 = vadd.f32 %v23, %v951
  %960 = vst [vmem:[%s3] sm:$0xff] %v952
  %961 = vst [vmem:[%s3 + $0x8] sm:$0xff] %v953
  %962 = vst [vmem:[%s3 + $0x10] sm:$0xff] %v954
  %963 = vst [vmem:[%s3 + $0x18] sm:$0xff] %v955
  %964 = vst [vmem:[%s3 + $0x20] sm:$0xff] %v956
  %965 = vst [vmem:[%s3 + $0x28] sm:$0xff] %v957
  %966 = vst [vmem:[%s3 + $0x30] sm:$0xff] %v958
  %967 = vst [vmem:[%s3 + $0x38] sm:$0xff] %v959
  %968 = vst [vmem:[%s4] sm:$0xff] %v936
  %969 = vst [vmem:[%s4 + $0x8] sm:$0xff] %v937
  %970 = vst [vmem:[%s4 + $0x10] sm:$0xff] %v938
  %971 = vst [vmem:[%s4 + $0x18] sm:$0xff] %v939
  %972 = vst [vmem:[%s4 + $0x20] sm:$0xff] %v940
  %973 = vst [vmem:[%s4 + $0x28] sm:$0xff] %v941
  %974 = vst [vmem:[%s4 + $0x30] sm:$0xff] %v942
  %975 = vst [vmem:[%s4 + $0x38] sm:$0xff] %v943
  // Predicated region
  $region14: #{pendulum_forward.1} parent=0 // pred_check
    _
  $region15: #{pendulum_forward.1} parent=0 // pred_check_branch
    %977 = sbr.rel (0) target = $region17
  $region16: #{pendulum_forward.1} parent=0 // pred_region
    _
  $region17: #{pendulum_forward.1} parent=0 // pred_fallthru
    _
  // Predicated region
  $region18: #{pendulum_forward.1} parent=0 // pred_check
    _
  $region19: #{pendulum_forward.1} parent=0 // pred_check_branch
    %979 = sbr.rel (0) target = $region21
  $region20: #{pendulum_forward.1} parent=0 // pred_region
    _
  $region21: #{pendulum_forward.1} parent=0 // pred_fallthru
    _
  // Predicated region
  $region22: #{pendulum_forward.1} parent=0 // pred_check
    _
  $region23: #{pendulum_forward.1} parent=0 // pred_check_branch
    %981 = sbr.rel (0) target = $region25
  $region24: #{pendulum_forward.1} parent=0 // pred_region
    _
  $region25: #{pendulum_forward.1} parent=0 // pred_fallthru
    _
  // Predicated region
  $region26: #{pendulum_forward.1} parent=0 // pred_check
    _
  $region27: #{pendulum_forward.1} parent=0 // pred_check_branch
    %983 = sbr.rel (0) target = $region29
  $region28: #{pendulum_forward.1} parent=0 // pred_region
    _
  $region29: #{pendulum_forward.1} parent=0 // pred_fallthru
    _

</llo_original>
